<compile_context>
chip_gen: v5e
topology: v5e:2x2
jax: 0.10.0
libtpu: 0.0.40
codegen_flags: <defaults>
</compile_context>

<pallas_src>
import math

import jax
import jax.numpy as jnp
from jax.experimental import pallas as pl
from jax.experimental.pallas import tpu as pltpu


def _round_up(x: int, m: int) -> int:
    return ((x + m - 1) // m) * m


def _vmem_capacity_bytes() -> int:
    try:
        return int(pltpu.get_tpu_info().vmem_capacity_bytes)
    except Exception:
        return 64 << 20  # conservative default (v7x per-TensorCore VMEM)


def _linear_embeddings_kernel(x_ref, w_ref, b_ref, o_ref):
    # x_ref: (tb, r*F)        grouped input rows
    # w_ref: (r*F, r*F*D)     block-diagonal expansion-with-weights matrix
    # b_ref: (1,   r*F*D)     f32 bias, tiled r times
    # o_ref: (tb,  r*F*D)     lane-dense output slab
    # One MXU matmul performs the whole broadcast-expand + per-feature scale;
    # the VPU only does the f32 bias add + final cast.
    y = jnp.dot(
        x_ref[...], w_ref[...],
        preferred_element_type=jnp.float32,
        precision=jax.lax.Precision.HIGHEST,
    )
    o_ref[...] = (y + b_ref[...]).astype(o_ref.dtype)


def _pick_group_factor(n_features: int, fd: int, itemsize: int) -> int:
    """Batch rows folded into one output row so the output row is 128-lane dense."""
    r = 128 // math.gcd(fd, 128)
    if r == 1:
        return 1
    r_f = r * n_features
    w_big_bytes = r_f * (r * fd) * itemsize
    if r_f > 1024 or w_big_bytes > (4 << 20):
        # TODO(synk): for such shapes, pad F*D up to a multiple of 128 instead of
        # falling back to (masked) narrow stores.
        return 1
    return r


def _pick_batch_tile(grouped_rows: int, row_lanes: int, itemsize: int,
                     sublane: int, vmem_cap: int, min_steps: int = 8) -> int:
    """Grouped rows per tile: ~vmem_cap/8 bytes per output buffer, sublane
    aligned, and >= min_steps grid steps whenever the batch allows it (keeps the
    DMA pipeline full and both v7x TensorCores busy)."""
    row_bytes = _round_up(row_lanes, 128) * itemsize
    target = max(2 << 20, min(16 << 20, vmem_cap // 8))
    tb = max(sublane, (target // row_bytes) // sublane * sublane)
    steps_cap = max(sublane, _round_up(pl.cdiv(grouped_rows, min_steps), sublane))
    return min(tb, steps_cap, 8192)


def linear_embeddings(x, weight, bias, *, batch_tile=None):
    """Pallas TPU LinearEmbeddings.forward:  (..., F) -> (..., F, D)."""
    if x.ndim < 2:
        raise ValueError(f"The input must have at least two dimensions, got ndim={x.ndim}")
    n_features, d_embedding = weight.shape
    if x.shape[-1] != n_features or bias.shape != (n_features, d_embedding):
        raise ValueError("shape mismatch between x / weight / bias")

    lead_shape = x.shape[:-1]
    batch = math.prod(lead_shape)
    fd = n_features * d_embedding
    itemsize = jnp.dtype(x.dtype).itemsize
    sublane = max(8, min(32, 32 // itemsize))      # 8 for f32, 16 bf16, 32 int8
    vmem_cap = _vmem_capacity_bytes()

    r = _pick_group_factor(n_features, fd, itemsize)
    r_f, r_fd = r * n_features, r * fd

    grouped = pl.cdiv(batch, r)                    # logical grouped rows
    tb = batch_tile or _pick_batch_tile(grouped, r_fd, itemsize, sublane, vmem_cap)
    grid = pl.cdiv(grouped, tb)
    g_pad = grid * tb
    batch_pad = g_pad * r

    x2 = x.reshape(batch, n_features)
    if batch_pad != batch:
        x2 = jnp.pad(x2, ((0, batch_pad - batch), (0, 0)))
    x_g = x2.reshape(g_pad, r_f)                   # free reshape: r rows per grouped row

    # Block-diagonal expansion matrix: w_big[a, a*D + j] = weight[a % F, j].
    cdtype = x.dtype
    w_rep = jnp.tile(weight.astype(cdtype), (r, 1))                           # (rF, D)
    w_big = (jnp.eye(r_f, dtype=cdtype)[:, :, None] * w_rep[None, :, :]
             ).reshape(r_f, r_fd)                                             # (rF, rF*D)
    # Bias stays f32 so the add happens on the f32 accumulator.
    b_flat = jnp.tile(bias.astype(jnp.float32).reshape(1, fd), (1, r))        # (1, rF*D)

    # VMEM budget: double-buffered x/out tiles + (also double-buffered) invariants.
    need = 2 * (tb * _round_up(r_fd, 128) * itemsize
                + tb * _round_up(r_f, 128) * itemsize
                + _round_up(r_f, sublane) * _round_up(r_fd, 128) * itemsize
                + 8 * _round_up(r_fd, 128) * 4)
    vmem_limit = int(max(16 << 20, min(need + (4 << 20), int(0.9 * vmem_cap))))

    out_g = pl.pallas_call(
        _linear_embeddings_kernel,
        out_shape=jax.ShapeDtypeStruct((g_pad, r_fd), x.dtype),
        grid_spec=pltpu.PrefetchScalarGridSpec(
            num_scalar_prefetch=0,
            grid=(grid,),
            in_specs=[
                pl.BlockSpec((tb, r_f), lambda i: (i, 0)),
                pl.BlockSpec((r_f, r_fd), lambda i: (0, 0)),   # invariant: not re-DMA'd
                pl.BlockSpec((1, r_fd), lambda i: (0, 0)),     # invariant: not re-DMA'd
            ],
            out_specs=pl.BlockSpec((tb, r_fd), lambda i: (i, 0)),
        ),
        compiler_params=pltpu.CompilerParams(
            dimension_semantics=("parallel",),
            vmem_limit_bytes=vmem_limit,
        ),
    )(x_g, w_big, b_flat)

    out2 = out_g.reshape(batch_pad, fd)
    if batch_pad != batch:
        out2 = out2[:batch]
    return out2.reshape(*lead_shape, n_features, d_embedding)
    # TODO(synk): if the consumer is another Pallas kernel, fuse this expansion
    # into it instead of materializing the (batch, F, D) output in HBM.


def init_linear_embeddings_params(key, n_features, d_embedding, dtype=jnp.float32):
    """Matches nn.init.uniform_(-d**-0.5, d**-0.5) for both weight and bias."""
    d_rsqrt = d_embedding ** (-0.5)
    kw, kb = jax.random.split(key)
    weight = jax.random.uniform(kw, (n_features, d_embedding), dtype,
                                minval=-d_rsqrt, maxval=d_rsqrt)
    bias = jax.random.uniform(kb, (n_features, d_embedding), dtype,
                              minval=-d_rsqrt, maxval=d_rsqrt)
    return weight, bias


if __name__ == "__main__":
    key = jax.random.PRNGKey(0)
    k_x, k_p = jax.random.split(key)

    batch_size = 10          # not a multiple of the grouping/tile -> exercises padding
    n_cont_features = 3
    d_embedding = 4

    x = jax.random.normal(k_x, (batch_size, n_cont_features), jnp.float32)
    weight, bias = init_linear_embeddings_params(k_p, n_cont_features, d_embedding)

    out = linear_embeddings(x, weight, bias)
    out = jax.block_until_ready(out)

    ref = x[..., None] * weight + bias[None]
    assert out.shape == (batch_size, n_cont_features, d_embedding)
    assert jnp.allclose(out, ref, atol=1e-5, rtol=1e-5), "mismatch vs reference"

    # docstring example shape from the PyTorch module
    x_doc = jax.random.normal(k_x, (2, n_cont_features), jnp.float32)
    out_doc = jax.block_until_ready(linear_embeddings(x_doc, weight, bias))
    ref_doc = x_doc[..., None] * weight + bias[None]
    assert out_doc.shape == (2, n_cont_features, d_embedding)
    assert jnp.allclose(out_doc, ref_doc, atol=1e-5, rtol=1e-5), \
        "mismatch vs reference (docstring shape)"

    # leading-dims case: (*, F) -> (*, F, D)
    x_nd = jax.random.normal(k_x, (2, 5, n_cont_features), jnp.float32)
    out_nd = jax.block_until_ready(linear_embeddings(x_nd, weight, bias))
    ref_nd = x_nd[..., None] * weight + bias
    assert out_nd.shape == (2, 5, n_cont_features, d_embedding)
    assert jnp.allclose(out_nd, ref_nd, atol=1e-5, rtol=1e-5), \
        "mismatch vs reference (leading dims)"

    print("KERNEL_OK")
</pallas_src>

<mosaic_0001>
module attributes {stable_mosaic.version = 11 : i64} {
  func.func @_linear_embeddings_kernel(%arg0: i32, %arg1: memref<8x96xf32, #tpu.memory_space<vmem>>, %arg2: memref<96x384xf32, #tpu.memory_space<vmem>>, %arg3: memref<1x384xf32, #tpu.memory_space<vmem>>, %arg4: memref<8x384xf32, #tpu.memory_space<vmem>>) attributes {dimension_semantics = [#tpu.dimension_semantics<parallel>], iteration_bounds = array<i64: 1>, scalar_prefetch = 0 : i64, scratch_operands = 0 : i64, tpu.core_type = #tpu.core_type<tc>, window_params = [{transform_indices = @transform_0, window_bounds = array<i64: 8, 96>}, {pipeline_mode = #tpu.pipeline_mode<synchronous>, transform_indices = @transform_1, window_bounds = array<i64: 96, 384>}, {pipeline_mode = #tpu.pipeline_mode<synchronous>, transform_indices = @transform_2, window_bounds = array<i64: 1, 384>}, {transform_indices = @transform_3, window_bounds = array<i64: 8, 384>}]} {
    %c0 = arith.constant 0 : index
    %c0_0 = arith.constant 0 : index
    %0 = vector.load %arg1[%c0, %c0_0] : memref<8x96xf32, #tpu.memory_space<vmem>>, vector<8x96xf32>
    %c0_1 = arith.constant 0 : index
    %c0_2 = arith.constant 0 : index
    %1 = vector.load %arg2[%c0_1, %c0_2] : memref<96x384xf32, #tpu.memory_space<vmem>>, vector<96x384xf32>
    %cst = arith.constant dense<0.000000e+00> : vector<8x384xf32>
    %2 = tpu.matmul %0, %1, %cst {dimension_numbers = #tpu.dot_dimension_numbers<[1], [0], [0], [1], [0, 0, 1, 1], [], []>, precision = #tpu.contract_precision<fp32>} : vector<8x96xf32>, vector<96x384xf32>, vector<8x384xf32> -> vector<8x384xf32>
    %c0_3 = arith.constant 0 : index
    %c0_4 = arith.constant 0 : index
    %3 = vector.load %arg3[%c0_3, %c0_4] : memref<1x384xf32, #tpu.memory_space<vmem>>, vector<1x384xf32>
    %4 = vector.broadcast %3 : vector<1x384xf32> to vector<8x384xf32>
    %5 = arith.addf %2, %4 : vector<8x384xf32>
    %c0_5 = arith.constant 0 : index
    %c0_6 = arith.constant 0 : index
    %6 = vector.load %arg4[%c0_5, %c0_6] : memref<8x384xf32, #tpu.memory_space<vmem>>, vector<8x384xf32>
    tpu.vector_store %arg4[%c0_5, %c0_6], %5 {strides = array<i32>} : memref<8x384xf32, #tpu.memory_space<vmem>>, vector<8x384xf32>,
    return
  }
  func.func @transform_0(%arg0: i32) -> (i32, i32) {
    %c0_i32 = arith.constant 0 : i32
    %c0_i32_0 = arith.constant 0 : i32
    return %arg0, %c0_i32 : i32, i32
  }
  func.func @transform_1(%arg0: i32) -> (i32, i32) {
    %c0_i32 = arith.constant 0 : i32
    %c0_i32_0 = arith.constant 0 : i32
    %c0_i32_1 = arith.constant 0 : i32
    return %c0_i32, %c0_i32_0 : i32, i32
  }
  func.func @transform_2(%arg0: i32) -> (i32, i32) {
    %c0_i32 = arith.constant 0 : i32
    %c0_i32_0 = arith.constant 0 : i32
    %c0_i32_1 = arith.constant 0 : i32
    return %c0_i32, %c0_i32_0 : i32, i32
  }
  func.func @transform_3(%arg0: i32) -> (i32, i32) {
    %c0_i32 = arith.constant 0 : i32
    %c0_i32_0 = arith.constant 0 : i32
    return %arg0, %c0_i32 : i32, i32
  }
}

</mosaic_0001>

<llo_original>
// kernel: tpu_custom_call.1
$region0: #{tpu_custom_call.1}
  #allocation0 [shape = 'u32[]', space=smem, size = 0x4, offset = 0x4, fixed_abs, tag = 'smem constant byte address 0x4 - core index']
  #allocation1 [shape = 'u32[72,128]{1,0:T(1,128)}', space=vmem, size = 0x9000, scoped, tag = 'internal scratch']
  %s0 = inlined_call_operand.hbm [shape: f32[8,96], index: 0, kind: input, shape index: {}]
  %s1 = inlined_call_operand.hbm [shape: f32[96,384], index: 1, kind: input, shape index: {}]
  %s2 = inlined_call_operand.hbm [shape: f32[1,384], index: 2, kind: input, shape index: {}]
  %s3 = inlined_call_operand.hbm [shape: f32[8,384], index: 3, kind: output, shape index: {}]
  %s4 = sld [smem:[#allocation0]]
  $region34: #{tpu_custom_call.1} parent=0
    _
  %s6 = ssub.s32 1, %s4
  %s7 = scalar_select 0, %s6, %s4
  $region1: #{tpu_custom_call.1} parent=0
    #allocation2 [shape = 'u8[4096]{0}', space=vmem, size = 0x1000, scoped, tag = 'input window, operand 0, single buffered']
    #allocation3 [shape = 's32[1]{0}', space=sflag, size = 0x4, scoped, tag = 'scoped memory for tpu_custom_call.1']
    #allocation4 [shape = 's32[1]{0}', space=sflag, size = 0x4, scoped, tag = 'scoped memory for tpu_custom_call.1']
    #allocation5 [shape = 'u8[147456]{0}', space=vmem, size = 0x24000, scoped, tag = 'input window, operand 1, single buffered']
    #allocation6 [shape = 's32[1]{0}', space=sflag, size = 0x4, scoped, tag = 'scoped memory for tpu_custom_call.1']
    #allocation7 [shape = 'u8[1536]{0}', space=vmem, size = 0x800, scoped, tag = 'input window, operand 2, single buffered']
    #allocation8 [shape = 'u8[12288]{0}', space=vmem, size = 0x3000, scoped, tag = 'output window, operand 0, single buffered']
    %8 = vsyncpa [#allocation3], 0
    %9 = vsyncpa [#allocation6], 0
    %10 = vsyncpa [#allocation4], 0
    // Predicated region
    $region2: #{tpu_custom_call.1} parent=1 // pred_check
      _
    $region3: #{tpu_custom_call.1} parent=1 // pred_check_branch
      %12 = sbr.rel (0) target = $region5
    $region4: #{tpu_custom_call.1} parent=1 // pred_region
      %14 = vsyncadd [#allocation3], 0
      %s16 = sshll.u32 %s0, 4
      %s17 = int_to_ptr.hbm [resolvable:$true] %s16
      %s18 = sshll.u32 [#allocation2], 4
      %s19 = int_to_ptr.vmem [resolvable:$true] %s18
      %21 = dma.hbm_to_vmem [thread:$0]  %s17, 128, %s19, [#allocation3]
    $region5: #{tpu_custom_call.1} parent=1 // pred_fallthru
      _
    // Predicated region
    $region6: #{tpu_custom_call.1} parent=1 // pred_check
      _
    $region7: #{tpu_custom_call.1} parent=1 // pred_check_branch
      %23 = sbr.rel (0) target = $region9
    $region8: #{tpu_custom_call.1} parent=1 // pred_region
      %25 = vsyncadd [#allocation6], 0
      %s26 = sshll.u32 %s1, 4
      %s27 = int_to_ptr.hbm [resolvable:$true] %s26
      %s28 = sshll.u32 [#allocation5], 4
      %s29 = int_to_ptr.vmem [resolvable:$true] %s28
      %34 = dma.hbm_to_vmem [thread:$0]  %s27, 4608, %s29, [#allocation6], 384, 384, 24
    $region9: #{tpu_custom_call.1} parent=1 // pred_fallthru
      _
    // Predicated region
    $region10: #{tpu_custom_call.1} parent=1 // pred_check
      _
    $region11: #{tpu_custom_call.1} parent=1 // pred_check_branch
      %36 = sbr.rel (0) target = $region13
    $region12: #{tpu_custom_call.1} parent=1 // pred_region
      %38 = vsyncadd [#allocation6], 0
      %s40 = sshll.u32 %s2, 4
      %s41 = int_to_ptr.hbm [resolvable:$true] %s40
      %s42 = sshll.u32 [#allocation7], 4
      %s43 = int_to_ptr.vmem [resolvable:$true] %s42
      %45 = dma.hbm_to_vmem [thread:$0]  %s41, 48, %s43, [#allocation6]
    $region13: #{tpu_custom_call.1} parent=1 // pred_fallthru
      _
    // Predicated region
    $region14: #{tpu_custom_call.1} parent=1 // pred_check
      _
    $region15: #{tpu_custom_call.1} parent=1 // pred_check_branch
      %47 = sbr.rel (0) target = $region17
    $region16: #{tpu_custom_call.1} parent=1 // pred_region
      %49 = dma.done [#allocation3], 128
    $region17: #{tpu_custom_call.1} parent=1 // pred_fallthru
      _
    // Predicated region
    $region18: #{tpu_custom_call.1} parent=1 // pred_check
      _
    $region19: #{tpu_custom_call.1} parent=1 // pred_check_branch
      %51 = sbr.rel (0) target = $region21
    $region20: #{tpu_custom_call.1} parent=1 // pred_region
      %53 = dma.done [#allocation6], 4608
    $region21: #{tpu_custom_call.1} parent=1 // pred_fallthru
      _
    // Predicated region
    $region22: #{tpu_custom_call.1} parent=1 // pred_check
      _
    $region23: #{tpu_custom_call.1} parent=1 // pred_check_branch
      %55 = sbr.rel (0) target = $region25
    $region24: #{tpu_custom_call.1} parent=1 // pred_region
      %57 = dma.done [#allocation6], 48
    $region25: #{tpu_custom_call.1} parent=1 // pred_fallthru
      _
    %v58 = vld [vmem:[#allocation2] sm:$0xff]
    %v59 = vld [vmem:[#allocation5] sm:$0xff]
    %v60 = vld [vmem:[#allocation5 + $0x8] sm:$0xff]
    %v61 = vld [vmem:[#allocation5 + $0x10] sm:$0xff]
    %v62 = vld [vmem:[#allocation5 + $0x18] sm:$0xff]
    %v63 = vld [vmem:[#allocation5 + $0x20] sm:$0xff]
    %v64 = vld [vmem:[#allocation5 + $0x28] sm:$0xff]
    %v65 = vld [vmem:[#allocation5 + $0x30] sm:$0xff]
    %v66 = vld [vmem:[#allocation5 + $0x38] sm:$0xff]
    %v67 = vld [vmem:[#allocation5 + $0x40] sm:$0xff]
    %v68 = vld [vmem:[#allocation5 + $0x48] sm:$0xff]
    %v69 = vld [vmem:[#allocation5 + $0x50] sm:$0xff]
    %v70 = vld [vmem:[#allocation5 + $0x58] sm:$0xff]
    %v71 = vld [vmem:[#allocation5 + $0x60] sm:$0xff]
    %v72 = vld [vmem:[#allocation5 + $0x68] sm:$0xff]
    %v73 = vld [vmem:[#allocation5 + $0x70] sm:$0xff]
    %v74 = vld [vmem:[#allocation5 + $0x78] sm:$0xff]
    %v75 = vld [vmem:[#allocation5 + $0x80] sm:$0xff]
    %v76 = vld [vmem:[#allocation5 + $0x88] sm:$0xff]
    %v77 = vld [vmem:[#allocation5 + $0x90] sm:$0xff]
    %v78 = vld [vmem:[#allocation5 + $0x98] sm:$0xff]
    %v79 = vld [vmem:[#allocation5 + $0xa0] sm:$0xff]
    %v80 = vld [vmem:[#allocation5 + $0xa8] sm:$0xff]
    %v81 = vld [vmem:[#allocation5 + $0xb0] sm:$0xff]
    %v82 = vld [vmem:[#allocation5 + $0xb8] sm:$0xff]
    %v83 = vld [vmem:[#allocation5 + $0xc0] sm:$0xff]
    %v84 = vld [vmem:[#allocation5 + $0xc8] sm:$0xff]
    %v85 = vld [vmem:[#allocation5 + $0xd0] sm:$0xff]
    %v86 = vld [vmem:[#allocation5 + $0xd8] sm:$0xff]
    %v87 = vld [vmem:[#allocation5 + $0xe0] sm:$0xff]
    %v88 = vld [vmem:[#allocation5 + $0xe8] sm:$0xff]
    %v89 = vld [vmem:[#allocation5 + $0xf0] sm:$0xff]
    %v90 = vld [vmem:[#allocation5 + $0xf8] sm:$0xff]
    %v91 = vld [vmem:[#allocation5 + $0x100] sm:$0xff]
    %v92 = vld [vmem:[#allocation5 + $0x108] sm:$0xff]
    %v93 = vld [vmem:[#allocation5 + $0x110] sm:$0xff]
    %v94 = vld [vmem:[#allocation5 + $0x118] sm:$0xff]
    %v95 = vld [vmem:[#allocation7] sm:$0x7]
    %v97 = vperm.slane %v95, 0
    %v98 = vperm.slane %v95, 1
    %v99 = vperm.slane %v95, 2
    %vm103 = vcmask 785408
    %v105 = vsel %vm103, %v58, 0
    %107 = vmatpush.msra.mxu0 0.0
    %108 = vmatpush.msra.mxu0 0.0
    %109 = vmatpush.msra.mxu0 0.0
    %110 = vmatpush.msra.mxu0 0.0
    %v111 = vand.u32 %v92, 4294901760
    %112 = vmatpush.msra.mxu0 %v111
    %v113 = vand.u32 %v89, 4294901760
    %114 = vmatpush.msra.mxu0 %v113
    %v115 = vand.u32 %v86, 4294901760
    %116 = vmatpush.msra.mxu0 %v115
    %v117 = vand.u32 %v83, 4294901760
    %118 = vmatpush.msra.mxu0 %v117
    %v119 = vand.u32 %v80, 4294901760
    %120 = vmatpush.msra.mxu0 %v119
    %v121 = vand.u32 %v77, 4294901760
    %122 = vmatpush.msra.mxu0 %v121
    %v123 = vand.u32 %v74, 4294901760
    %124 = vmatpush.msra.mxu0 %v123
    %v125 = vand.u32 %v71, 4294901760
    %126 = vmatpush.msra.mxu0 %v125
    %v127 = vand.u32 %v68, 4294901760
    %128 = vmatpush.msra.mxu0 %v127
    %v129 = vand.u32 %v65, 4294901760
    %130 = vmatpush.msra.mxu0 %v129
    %v131 = vand.u32 %v62, 4294901760
    %132 = vmatpush.msra.mxu0 %v131
    %v133 = vand.u32 %v59, 4294901760
    %134 = vmatpush.msra.mxu0 %v133
    %v135 = vand.u32 %v105, 4294901760
    %v136 = vsub.f32 %v105, %v135
    %v137 = vand.u32 %v136, 4294901760
    %v138 = vsub.f32 %v136, %v137
    %v139 = vand.u32 %v138, 4294901760
    %140 = vmatmul.f32.gmra.mxu0 %v139
    %v141 = vpop.f32.mrf.mxu0
    %v142 = vadd.f32 %v97, %v141
    %143 = vdwg.mxu0
    %144 = vmatpush.msra.mxu0 0.0
    %145 = vmatpush.msra.mxu0 0.0
    %146 = vmatpush.msra.mxu0 0.0
    %147 = vmatpush.msra.mxu0 0.0
    %v148 = vand.u32 %v92, 4294901760
    %v149 = vsub.f32 %v92, %v148
    %v150 = vand.u32 %v149, 4294901760
    %v151 = vsub.f32 %v149, %v150
    %v152 = vand.u32 %v151, 4294901760
    %153 = vmatpush.msra.mxu0 %v152
    %v154 = vand.u32 %v89, 4294901760
    %v155 = vsub.f32 %v89, %v154
    %v156 = vand.u32 %v155, 4294901760
    %v157 = vsub.f32 %v155, %v156
    %v158 = vand.u32 %v157, 4294901760
    %159 = vmatpush.msra.mxu0 %v158
    %v160 = vand.u32 %v86, 4294901760
    %v161 = vsub.f32 %v86, %v160
    %v162 = vand.u32 %v161, 4294901760
    %v163 = vsub.f32 %v161, %v162
    %v164 = vand.u32 %v163, 4294901760
    %165 = vmatpush.msra.mxu0 %v164
    %v166 = vand.u32 %v83, 4294901760
    %v167 = vsub.f32 %v83, %v166
    %v168 = vand.u32 %v167, 4294901760
    %v169 = vsub.f32 %v167, %v168
    %v170 = vand.u32 %v169, 4294901760
    %171 = vmatpush.msra.mxu0 %v170
    %v172 = vand.u32 %v80, 4294901760
    %v173 = vsub.f32 %v80, %v172
    %v174 = vand.u32 %v173, 4294901760
    %v175 = vsub.f32 %v173, %v174
    %v176 = vand.u32 %v175, 4294901760
    %177 = vmatpush.msra.mxu0 %v176
    %v178 = vand.u32 %v77, 4294901760
    %v179 = vsub.f32 %v77, %v178
    %v180 = vand.u32 %v179, 4294901760
    %v181 = vsub.f32 %v179, %v180
    %v182 = vand.u32 %v181, 4294901760
    %183 = vmatpush.msra.mxu0 %v182
    %v184 = vand.u32 %v74, 4294901760
    %v185 = vsub.f32 %v74, %v184
    %v186 = vand.u32 %v185, 4294901760
    %v187 = vsub.f32 %v185, %v186
    %v188 = vand.u32 %v187, 4294901760
    %189 = vmatpush.msra.mxu0 %v188
    %v190 = vand.u32 %v71, 4294901760
    %v191 = vsub.f32 %v71, %v190
    %v192 = vand.u32 %v191, 4294901760
    %v193 = vsub.f32 %v191, %v192
    %v194 = vand.u32 %v193, 4294901760
    %195 = vmatpush.msra.mxu0 %v194
    %v196 = vand.u32 %v68, 4294901760
    %v197 = vsub.f32 %v68, %v196
    %v198 = vand.u32 %v197, 4294901760
    %v199 = vsub.f32 %v197, %v198
    %v200 = vand.u32 %v199, 4294901760
    %201 = vmatpush.msra.mxu0 %v200
    %v202 = vand.u32 %v65, 4294901760
    %v203 = vsub.f32 %v65, %v202
    %v204 = vand.u32 %v203, 4294901760
    %v205 = vsub.f32 %v203, %v204
    %v206 = vand.u32 %v205, 4294901760
    %207 = vmatpush.msra.mxu0 %v206
    %v208 = vand.u32 %v62, 4294901760
    %v209 = vsub.f32 %v62, %v208
    %v210 = vand.u32 %v209, 4294901760
    %v211 = vsub.f32 %v209, %v210
    %v212 = vand.u32 %v211, 4294901760
    %213 = vmatpush.msra.mxu0 %v212
    %v214 = vand.u32 %v59, 4294901760
    %v215 = vsub.f32 %v59, %v214
    %v216 = vand.u32 %v215, 4294901760
    %v217 = vsub.f32 %v215, %v216
    %v218 = vand.u32 %v217, 4294901760
    %219 = vmatpush.msra.mxu0 %v218
    %v220 = vand.u32 %v105, 4294901760
    %221 = vmatmul.f32.gmra.mxu0 %v220
    %v222 = vpop.f32.mrf.mxu0
    %v223 = vadd.f32 %v142, %v222
    %224 = vdwg.mxu0
    %225 = vmatpush.msra.mxu0 0.0
    %226 = vmatpush.msra.mxu0 0.0
    %227 = vmatpush.msra.mxu0 0.0
    %228 = vmatpush.msra.mxu0 0.0
    %v229 = vand.u32 %v92, 4294901760
    %v230 = vsub.f32 %v92, %v229
    %231 = vmatpush.msra.mxu0 %v230
    %v232 = vand.u32 %v89, 4294901760
    %v233 = vsub.f32 %v89, %v232
    %234 = vmatpush.msra.mxu0 %v233
    %v235 = vand.u32 %v86, 4294901760
    %v236 = vsub.f32 %v86, %v235
    %237 = vmatpush.msra.mxu0 %v236
    %v238 = vand.u32 %v83, 4294901760
    %v239 = vsub.f32 %v83, %v238
    %240 = vmatpush.msra.mxu0 %v239
    %v241 = vand.u32 %v80, 4294901760
    %v242 = vsub.f32 %v80, %v241
    %243 = vmatpush.msra.mxu0 %v242
    %v244 = vand.u32 %v77, 4294901760
    %v245 = vsub.f32 %v77, %v244
    %246 = vmatpush.msra.mxu0 %v245
    %v247 = vand.u32 %v74, 4294901760
    %v248 = vsub.f32 %v74, %v247
    %249 = vmatpush.msra.mxu0 %v248
    %v250 = vand.u32 %v71, 4294901760
    %v251 = vsub.f32 %v71, %v250
    %252 = vmatpush.msra.mxu0 %v251
    %v253 = vand.u32 %v68, 4294901760
    %v254 = vsub.f32 %v68, %v253
    %255 = vmatpush.msra.mxu0 %v254
    %v256 = vand.u32 %v65, 4294901760
    %v257 = vsub.f32 %v65, %v256
    %258 = vmatpush.msra.mxu0 %v257
    %v259 = vand.u32 %v62, 4294901760
    %v260 = vsub.f32 %v62, %v259
    %261 = vmatpush.msra.mxu0 %v260
    %v262 = vand.u32 %v59, 4294901760
    %v263 = vsub.f32 %v59, %v262
    %264 = vmatpush.msra.mxu0 %v263
    %v265 = vand.u32 %v105, 4294901760
    %v266 = vsub.f32 %v105, %v265
    %267 = vmatmul.f32.gmra.mxu0 %v266
    %v268 = vpop.f32.mrf.mxu0
    %v269 = vadd.f32 %v223, %v268
    %270 = vdwg.mxu0
    %271 = vmatpush.msra.mxu0 0.0
    %272 = vmatpush.msra.mxu0 0.0
    %273 = vmatpush.msra.mxu0 0.0
    %274 = vmatpush.msra.mxu0 0.0
    %v275 = vand.u32 %v92, 4294901760
    %276 = vmatpush.msra.mxu0 %v275
    %v277 = vand.u32 %v89, 4294901760
    %278 = vmatpush.msra.mxu0 %v277
    %v279 = vand.u32 %v86, 4294901760
    %280 = vmatpush.msra.mxu0 %v279
    %v281 = vand.u32 %v83, 4294901760
    %282 = vmatpush.msra.mxu0 %v281
    %v283 = vand.u32 %v80, 4294901760
    %284 = vmatpush.msra.mxu0 %v283
    %v285 = vand.u32 %v77, 4294901760
    %286 = vmatpush.msra.mxu0 %v285
    %v287 = vand.u32 %v74, 4294901760
    %288 = vmatpush.msra.mxu0 %v287
    %v289 = vand.u32 %v71, 4294901760
    %290 = vmatpush.msra.mxu0 %v289
    %v291 = vand.u32 %v68, 4294901760
    %292 = vmatpush.msra.mxu0 %v291
    %v293 = vand.u32 %v65, 4294901760
    %294 = vmatpush.msra.mxu0 %v293
    %v295 = vand.u32 %v62, 4294901760
    %296 = vmatpush.msra.mxu0 %v295
    %v297 = vand.u32 %v59, 4294901760
    %298 = vmatpush.msra.mxu0 %v297
    %v299 = vand.u32 %v105, 4294901760
    %v300 = vsub.f32 %v105, %v299
    %v301 = vand.u32 %v300, 4294901760
    %302 = vmatmul.f32.gmra.mxu0 %v301
    %v303 = vpop.f32.mrf.mxu0
    %v304 = vadd.f32 %v269, %v303
    %305 = vdwg.mxu0
    %306 = vmatpush.msra.mxu0 0.0
    %307 = vmatpush.msra.mxu0 0.0
    %308 = vmatpush.msra.mxu0 0.0
    %309 = vmatpush.msra.mxu0 0.0
    %v310 = vand.u32 %v92, 4294901760
    %v311 = vsub.f32 %v92, %v310
    %v312 = vand.u32 %v311, 4294901760
    %313 = vmatpush.msra.mxu0 %v312
    %v314 = vand.u32 %v89, 4294901760
    %v315 = vsub.f32 %v89, %v314
    %v316 = vand.u32 %v315, 4294901760
    %317 = vmatpush.msra.mxu0 %v316
    %v318 = vand.u32 %v86, 4294901760
    %v319 = vsub.f32 %v86, %v318
    %v320 = vand.u32 %v319, 4294901760
    %321 = vmatpush.msra.mxu0 %v320
    %v322 = vand.u32 %v83, 4294901760
    %v323 = vsub.f32 %v83, %v322
    %v324 = vand.u32 %v323, 4294901760
    %325 = vmatpush.msra.mxu0 %v324
    %v326 = vand.u32 %v80, 4294901760
    %v327 = vsub.f32 %v80, %v326
    %v328 = vand.u32 %v327, 4294901760
    %329 = vmatpush.msra.mxu0 %v328
    %v330 = vand.u32 %v77, 4294901760
    %v331 = vsub.f32 %v77, %v330
    %v332 = vand.u32 %v331, 4294901760
    %333 = vmatpush.msra.mxu0 %v332
    %v334 = vand.u32 %v74, 4294901760
    %v335 = vsub.f32 %v74, %v334
    %v336 = vand.u32 %v335, 4294901760
    %337 = vmatpush.msra.mxu0 %v336
    %v338 = vand.u32 %v71, 4294901760
    %v339 = vsub.f32 %v71, %v338
    %v340 = vand.u32 %v339, 4294901760
    %341 = vmatpush.msra.mxu0 %v340
    %v342 = vand.u32 %v68, 4294901760
    %v343 = vsub.f32 %v68, %v342
    %v344 = vand.u32 %v343, 4294901760
    %345 = vmatpush.msra.mxu0 %v344
    %v346 = vand.u32 %v65, 4294901760
    %v347 = vsub.f32 %v65, %v346
    %v348 = vand.u32 %v347, 4294901760
    %349 = vmatpush.msra.mxu0 %v348
    %v350 = vand.u32 %v62, 4294901760
    %v351 = vsub.f32 %v62, %v350
    %v352 = vand.u32 %v351, 4294901760
    %353 = vmatpush.msra.mxu0 %v352
    %v354 = vand.u32 %v59, 4294901760
    %v355 = vsub.f32 %v59, %v354
    %v356 = vand.u32 %v355, 4294901760
    %357 = vmatpush.msra.mxu0 %v356
    %v358 = vand.u32 %v105, 4294901760
    %359 = vmatmul.f32.gmra.mxu0 %v358
    %v360 = vpop.f32.mrf.mxu0
    %v361 = vadd.f32 %v304, %v360
    %362 = vdwg.mxu0
    %363 = vmatpush.msra.mxu0 0.0
    %364 = vmatpush.msra.mxu0 0.0
    %365 = vmatpush.msra.mxu0 0.0
    %366 = vmatpush.msra.mxu0 0.0
    %v367 = vand.u32 %v92, 4294901760
    %368 = vmatpush.msra.mxu0 %v367
    %v369 = vand.u32 %v89, 4294901760
    %370 = vmatpush.msra.mxu0 %v369
    %v371 = vand.u32 %v86, 4294901760
    %372 = vmatpush.msra.mxu0 %v371
    %v373 = vand.u32 %v83, 4294901760
    %374 = vmatpush.msra.mxu0 %v373
    %v375 = vand.u32 %v80, 4294901760
    %376 = vmatpush.msra.mxu0 %v375
    %v377 = vand.u32 %v77, 4294901760
    %378 = vmatpush.msra.mxu0 %v377
    %v379 = vand.u32 %v74, 4294901760
    %380 = vmatpush.msra.mxu0 %v379
    %v381 = vand.u32 %v71, 4294901760
    %382 = vmatpush.msra.mxu0 %v381
    %v383 = vand.u32 %v68, 4294901760
    %384 = vmatpush.msra.mxu0 %v383
    %v385 = vand.u32 %v65, 4294901760
    %386 = vmatpush.msra.mxu0 %v385
    %v387 = vand.u32 %v62, 4294901760
    %388 = vmatpush.msra.mxu0 %v387
    %v389 = vand.u32 %v59, 4294901760
    %390 = vmatpush.msra.mxu0 %v389
    %v391 = vand.u32 %v105, 4294901760
    %392 = vmatmul.f32.gmra.mxu0 %v391
    %v393 = vpop.f32.mrf.mxu0
    %v394 = vadd.f32 %v361, %v393
    %395 = vdwg.mxu0
    %396 = vmatpush.msra.mxu0 0.0
    %397 = vmatpush.msra.mxu0 0.0
    %398 = vmatpush.msra.mxu0 0.0
    %399 = vmatpush.msra.mxu0 0.0
    %v400 = vand.u32 %v93, 4294901760
    %401 = vmatpush.msra.mxu0 %v400
    %v402 = vand.u32 %v90, 4294901760
    %403 = vmatpush.msra.mxu0 %v402
    %v404 = vand.u32 %v87, 4294901760
    %405 = vmatpush.msra.mxu0 %v404
    %v406 = vand.u32 %v84, 4294901760
    %407 = vmatpush.msra.mxu0 %v406
    %v408 = vand.u32 %v81, 4294901760
    %409 = vmatpush.msra.mxu0 %v408
    %v410 = vand.u32 %v78, 4294901760
    %411 = vmatpush.msra.mxu0 %v410
    %v412 = vand.u32 %v75, 4294901760
    %413 = vmatpush.msra.mxu0 %v412
    %v414 = vand.u32 %v72, 4294901760
    %415 = vmatpush.msra.mxu0 %v414
    %v416 = vand.u32 %v69, 4294901760
    %417 = vmatpush.msra.mxu0 %v416
    %v418 = vand.u32 %v66, 4294901760
    %419 = vmatpush.msra.mxu0 %v418
    %v420 = vand.u32 %v63, 4294901760
    %421 = vmatpush.msra.mxu0 %v420
    %v422 = vand.u32 %v60, 4294901760
    %423 = vmatpush.msra.mxu0 %v422
    %v424 = vand.u32 %v105, 4294901760
    %v425 = vsub.f32 %v105, %v424
    %v426 = vand.u32 %v425, 4294901760
    %v427 = vsub.f32 %v425, %v426
    %v428 = vand.u32 %v427, 4294901760
    %429 = vmatmul.f32.gmra.mxu0 %v428
    %v430 = vpop.f32.mrf.mxu0
    %v431 = vadd.f32 %v98, %v430
    %432 = vdwg.mxu0
    %433 = vmatpush.msra.mxu0 0.0
    %434 = vmatpush.msra.mxu0 0.0
    %435 = vmatpush.msra.mxu0 0.0
    %436 = vmatpush.msra.mxu0 0.0
    %v437 = vand.u32 %v93, 4294901760
    %v438 = vsub.f32 %v93, %v437
    %v439 = vand.u32 %v438, 4294901760
    %v440 = vsub.f32 %v438, %v439
    %v441 = vand.u32 %v440, 4294901760
    %442 = vmatpush.msra.mxu0 %v441
    %v443 = vand.u32 %v90, 4294901760
    %v444 = vsub.f32 %v90, %v443
    %v445 = vand.u32 %v444, 4294901760
    %v446 = vsub.f32 %v444, %v445
    %v447 = vand.u32 %v446, 4294901760
    %448 = vmatpush.msra.mxu0 %v447
    %v449 = vand.u32 %v87, 4294901760
    %v450 = vsub.f32 %v87, %v449
    %v451 = vand.u32 %v450, 4294901760
    %v452 = vsub.f32 %v450, %v451
    %v453 = vand.u32 %v452, 4294901760
    %454 = vmatpush.msra.mxu0 %v453
    %v455 = vand.u32 %v84, 4294901760
    %v456 = vsub.f32 %v84, %v455
    %v457 = vand.u32 %v456, 4294901760
    %v458 = vsub.f32 %v456, %v457
    %v459 = vand.u32 %v458, 4294901760
    %460 = vmatpush.msra.mxu0 %v459
    %v461 = vand.u32 %v81, 4294901760
    %v462 = vsub.f32 %v81, %v461
    %v463 = vand.u32 %v462, 4294901760
    %v464 = vsub.f32 %v462, %v463
    %v465 = vand.u32 %v464, 4294901760
    %466 = vmatpush.msra.mxu0 %v465
    %v467 = vand.u32 %v78, 4294901760
    %v468 = vsub.f32 %v78, %v467
    %v469 = vand.u32 %v468, 4294901760
    %v470 = vsub.f32 %v468, %v469
    %v471 = vand.u32 %v470, 4294901760
    %472 = vmatpush.msra.mxu0 %v471
    %v473 = vand.u32 %v75, 4294901760
    %v474 = vsub.f32 %v75, %v473
    %v475 = vand.u32 %v474, 4294901760
    %v476 = vsub.f32 %v474, %v475
    %v477 = vand.u32 %v476, 4294901760
    %478 = vmatpush.msra.mxu0 %v477
    %v479 = vand.u32 %v72, 4294901760
    %v480 = vsub.f32 %v72, %v479
    %v481 = vand.u32 %v480, 4294901760
    %v482 = vsub.f32 %v480, %v481
    %v483 = vand.u32 %v482, 4294901760
    %484 = vmatpush.msra.mxu0 %v483
    %v485 = vand.u32 %v69, 4294901760
    %v486 = vsub.f32 %v69, %v485
    %v487 = vand.u32 %v486, 4294901760
    %v488 = vsub.f32 %v486, %v487
    %v489 = vand.u32 %v488, 4294901760
    %490 = vmatpush.msra.mxu0 %v489
    %v491 = vand.u32 %v66, 4294901760
    %v492 = vsub.f32 %v66, %v491
    %v493 = vand.u32 %v492, 4294901760
    %v494 = vsub.f32 %v492, %v493
    %v495 = vand.u32 %v494, 4294901760
    %496 = vmatpush.msra.mxu0 %v495
    %v497 = vand.u32 %v63, 4294901760
    %v498 = vsub.f32 %v63, %v497
    %v499 = vand.u32 %v498, 4294901760
    %v500 = vsub.f32 %v498, %v499
    %v501 = vand.u32 %v500, 4294901760
    %502 = vmatpush.msra.mxu0 %v501
    %v503 = vand.u32 %v60, 4294901760
    %v504 = vsub.f32 %v60, %v503
    %v505 = vand.u32 %v504, 4294901760
    %v506 = vsub.f32 %v504, %v505
    %v507 = vand.u32 %v506, 4294901760
    %508 = vmatpush.msra.mxu0 %v507
    %v509 = vand.u32 %v105, 4294901760
    %510 = vmatmul.f32.gmra.mxu0 %v509
    %v511 = vpop.f32.mrf.mxu0
    %v512 = vadd.f32 %v431, %v511
    %513 = vdwg.mxu0
    %514 = vmatpush.msra.mxu0 0.0
    %515 = vmatpush.msra.mxu0 0.0
    %516 = vmatpush.msra.mxu0 0.0
    %517 = vmatpush.msra.mxu0 0.0
    %v518 = vand.u32 %v93, 4294901760
    %v519 = vsub.f32 %v93, %v518
    %520 = vmatpush.msra.mxu0 %v519
    %v521 = vand.u32 %v90, 4294901760
    %v522 = vsub.f32 %v90, %v521
    %523 = vmatpush.msra.mxu0 %v522
    %v524 = vand.u32 %v87, 4294901760
    %v525 = vsub.f32 %v87, %v524
    %526 = vmatpush.msra.mxu0 %v525
    %v527 = vand.u32 %v84, 4294901760
    %v528 = vsub.f32 %v84, %v527
    %529 = vmatpush.msra.mxu0 %v528
    %v530 = vand.u32 %v81, 4294901760
    %v531 = vsub.f32 %v81, %v530
    %532 = vmatpush.msra.mxu0 %v531
    %v533 = vand.u32 %v78, 4294901760
    %v534 = vsub.f32 %v78, %v533
    %535 = vmatpush.msra.mxu0 %v534
    %v536 = vand.u32 %v75, 4294901760
    %v537 = vsub.f32 %v75, %v536
    %538 = vmatpush.msra.mxu0 %v537
    %v539 = vand.u32 %v72, 4294901760
    %v540 = vsub.f32 %v72, %v539
    %541 = vmatpush.msra.mxu0 %v540
    %v542 = vand.u32 %v69, 4294901760
    %v543 = vsub.f32 %v69, %v542
    %544 = vmatpush.msra.mxu0 %v543
    %v545 = vand.u32 %v66, 4294901760
    %v546 = vsub.f32 %v66, %v545
    %547 = vmatpush.msra.mxu0 %v546
    %v548 = vand.u32 %v63, 4294901760
    %v549 = vsub.f32 %v63, %v548
    %550 = vmatpush.msra.mxu0 %v549
    %v551 = vand.u32 %v60, 4294901760
    %v552 = vsub.f32 %v60, %v551
    %553 = vmatpush.msra.mxu0 %v552
    %v554 = vand.u32 %v105, 4294901760
    %v555 = vsub.f32 %v105, %v554
    %556 = vmatmul.f32.gmra.mxu0 %v555
    %v557 = vpop.f32.mrf.mxu0
    %v558 = vadd.f32 %v512, %v557
    %559 = vdwg.mxu0
    %560 = vmatpush.msra.mxu0 0.0
    %561 = vmatpush.msra.mxu0 0.0
    %562 = vmatpush.msra.mxu0 0.0
    %563 = vmatpush.msra.mxu0 0.0
    %v564 = vand.u32 %v93, 4294901760
    %565 = vmatpush.msra.mxu0 %v564
    %v566 = vand.u32 %v90, 4294901760
    %567 = vmatpush.msra.mxu0 %v566
    %v568 = vand.u32 %v87, 4294901760
    %569 = vmatpush.msra.mxu0 %v568
    %v570 = vand.u32 %v84, 4294901760
    %571 = vmatpush.msra.mxu0 %v570
    %v572 = vand.u32 %v81, 4294901760
    %573 = vmatpush.msra.mxu0 %v572
    %v574 = vand.u32 %v78, 4294901760
    %575 = vmatpush.msra.mxu0 %v574
    %v576 = vand.u32 %v75, 4294901760
    %577 = vmatpush.msra.mxu0 %v576
    %v578 = vand.u32 %v72, 4294901760
    %579 = vmatpush.msra.mxu0 %v578
    %v580 = vand.u32 %v69, 4294901760
    %581 = vmatpush.msra.mxu0 %v580
    %v582 = vand.u32 %v66, 4294901760
    %583 = vmatpush.msra.mxu0 %v582
    %v584 = vand.u32 %v63, 4294901760
    %585 = vmatpush.msra.mxu0 %v584
    %v586 = vand.u32 %v60, 4294901760
    %587 = vmatpush.msra.mxu0 %v586
    %v588 = vand.u32 %v105, 4294901760
    %v589 = vsub.f32 %v105, %v588
    %v590 = vand.u32 %v589, 4294901760
    %591 = vmatmul.f32.gmra.mxu0 %v590
    %v592 = vpop.f32.mrf.mxu0
    %v593 = vadd.f32 %v558, %v592
    %594 = vdwg.mxu0
    %595 = vmatpush.msra.mxu0 0.0
    %596 = vmatpush.msra.mxu0 0.0
    %597 = vmatpush.msra.mxu0 0.0
    %598 = vmatpush.msra.mxu0 0.0
    %v599 = vand.u32 %v93, 4294901760
    %v600 = vsub.f32 %v93, %v599
    %v601 = vand.u32 %v600, 4294901760
    %602 = vmatpush.msra.mxu0 %v601
    %v603 = vand.u32 %v90, 4294901760
    %v604 = vsub.f32 %v90, %v603
    %v605 = vand.u32 %v604, 4294901760
    %606 = vmatpush.msra.mxu0 %v605
    %v607 = vand.u32 %v87, 4294901760
    %v608 = vsub.f32 %v87, %v607
    %v609 = vand.u32 %v608, 4294901760
    %610 = vmatpush.msra.mxu0 %v609
    %v611 = vand.u32 %v84, 4294901760
    %v612 = vsub.f32 %v84, %v611
    %v613 = vand.u32 %v612, 4294901760
    %614 = vmatpush.msra.mxu0 %v613
    %v615 = vand.u32 %v81, 4294901760
    %v616 = vsub.f32 %v81, %v615
    %v617 = vand.u32 %v616, 4294901760
    %618 = vmatpush.msra.mxu0 %v617
    %v619 = vand.u32 %v78, 4294901760
    %v620 = vsub.f32 %v78, %v619
    %v621 = vand.u32 %v620, 4294901760
    %622 = vmatpush.msra.mxu0 %v621
    %v623 = vand.u32 %v75, 4294901760
    %v624 = vsub.f32 %v75, %v623
    %v625 = vand.u32 %v624, 4294901760
    %626 = vmatpush.msra.mxu0 %v625
    %v627 = vand.u32 %v72, 4294901760
    %v628 = vsub.f32 %v72, %v627
    %v629 = vand.u32 %v628, 4294901760
    %630 = vmatpush.msra.mxu0 %v629
    %v631 = vand.u32 %v69, 4294901760
    %v632 = vsub.f32 %v69, %v631
    %v633 = vand.u32 %v632, 4294901760
    %634 = vmatpush.msra.mxu0 %v633
    %v635 = vand.u32 %v66, 4294901760
    %v636 = vsub.f32 %v66, %v635
    %v637 = vand.u32 %v636, 4294901760
    %638 = vmatpush.msra.mxu0 %v637
    %v639 = vand.u32 %v63, 4294901760
    %v640 = vsub.f32 %v63, %v639
    %v641 = vand.u32 %v640, 4294901760
    %642 = vmatpush.msra.mxu0 %v641
    %v643 = vand.u32 %v60, 4294901760
    %v644 = vsub.f32 %v60, %v643
    %v645 = vand.u32 %v644, 4294901760
    %646 = vmatpush.msra.mxu0 %v645
    %v647 = vand.u32 %v105, 4294901760
    %648 = vmatmul.f32.gmra.mxu0 %v647
    %v649 = vpop.f32.mrf.mxu0
    %v650 = vadd.f32 %v593, %v649
    %651 = vdwg.mxu0
    %652 = vmatpush.msra.mxu0 0.0
    %653 = vmatpush.msra.mxu0 0.0
    %654 = vmatpush.msra.mxu0 0.0
    %655 = vmatpush.msra.mxu0 0.0
    %v656 = vand.u32 %v93, 4294901760
    %657 = vmatpush.msra.mxu0 %v656
    %v658 = vand.u32 %v90, 4294901760
    %659 = vmatpush.msra.mxu0 %v658
    %v660 = vand.u32 %v87, 4294901760
    %661 = vmatpush.msra.mxu0 %v660
    %v662 = vand.u32 %v84, 4294901760
    %663 = vmatpush.msra.mxu0 %v662
    %v664 = vand.u32 %v81, 4294901760
    %665 = vmatpush.msra.mxu0 %v664
    %v666 = vand.u32 %v78, 4294901760
    %667 = vmatpush.msra.mxu0 %v666
    %v668 = vand.u32 %v75, 4294901760
    %669 = vmatpush.msra.mxu0 %v668
    %v670 = vand.u32 %v72, 4294901760
    %671 = vmatpush.msra.mxu0 %v670
    %v672 = vand.u32 %v69, 4294901760
    %673 = vmatpush.msra.mxu0 %v672
    %v674 = vand.u32 %v66, 4294901760
    %675 = vmatpush.msra.mxu0 %v674
    %v676 = vand.u32 %v63, 4294901760
    %677 = vmatpush.msra.mxu0 %v676
    %v678 = vand.u32 %v60, 4294901760
    %679 = vmatpush.msra.mxu0 %v678
    %v680 = vand.u32 %v105, 4294901760
    %681 = vmatmul.f32.gmra.mxu0 %v680
    %v682 = vpop.f32.mrf.mxu0
    %v683 = vadd.f32 %v650, %v682
    %684 = vdwg.mxu0
    %685 = vmatpush.msra.mxu0 0.0
    %686 = vmatpush.msra.mxu0 0.0
    %687 = vmatpush.msra.mxu0 0.0
    %688 = vmatpush.msra.mxu0 0.0
    %v689 = vand.u32 %v94, 4294901760
    %690 = vmatpush.msra.mxu0 %v689
    %v691 = vand.u32 %v91, 4294901760
    %692 = vmatpush.msra.mxu0 %v691
    %v693 = vand.u32 %v88, 4294901760
    %694 = vmatpush.msra.mxu0 %v693
    %v695 = vand.u32 %v85, 4294901760
    %696 = vmatpush.msra.mxu0 %v695
    %v697 = vand.u32 %v82, 4294901760
    %698 = vmatpush.msra.mxu0 %v697
    %v699 = vand.u32 %v79, 4294901760
    %700 = vmatpush.msra.mxu0 %v699
    %v701 = vand.u32 %v76, 4294901760
    %702 = vmatpush.msra.mxu0 %v701
    %v703 = vand.u32 %v73, 4294901760
    %704 = vmatpush.msra.mxu0 %v703
    %v705 = vand.u32 %v70, 4294901760
    %706 = vmatpush.msra.mxu0 %v705
    %v707 = vand.u32 %v67, 4294901760
    %708 = vmatpush.msra.mxu0 %v707
    %v709 = vand.u32 %v64, 4294901760
    %710 = vmatpush.msra.mxu0 %v709
    %v711 = vand.u32 %v61, 4294901760
    %712 = vmatpush.msra.mxu0 %v711
    %v713 = vand.u32 %v105, 4294901760
    %v714 = vsub.f32 %v105, %v713
    %v715 = vand.u32 %v714, 4294901760
    %v716 = vsub.f32 %v714, %v715
    %v717 = vand.u32 %v716, 4294901760
    %718 = vmatmul.f32.gmra.mxu0 %v717
    %v719 = vpop.f32.mrf.mxu0
    %v720 = vadd.f32 %v99, %v719
    %721 = vdwg.mxu0
    %722 = vmatpush.msra.mxu0 0.0
    %723 = vmatpush.msra.mxu0 0.0
    %724 = vmatpush.msra.mxu0 0.0
    %725 = vmatpush.msra.mxu0 0.0
    %v726 = vand.u32 %v94, 4294901760
    %v727 = vsub.f32 %v94, %v726
    %v728 = vand.u32 %v727, 4294901760
    %v729 = vsub.f32 %v727, %v728
    %v730 = vand.u32 %v729, 4294901760
    %731 = vmatpush.msra.mxu0 %v730
    %v732 = vand.u32 %v91, 4294901760
    %v733 = vsub.f32 %v91, %v732
    %v734 = vand.u32 %v733, 4294901760
    %v735 = vsub.f32 %v733, %v734
    %v736 = vand.u32 %v735, 4294901760
    %737 = vmatpush.msra.mxu0 %v736
    %v738 = vand.u32 %v88, 4294901760
    %v739 = vsub.f32 %v88, %v738
    %v740 = vand.u32 %v739, 4294901760
    %v741 = vsub.f32 %v739, %v740
    %v742 = vand.u32 %v741, 4294901760
    %743 = vmatpush.msra.mxu0 %v742
    %v744 = vand.u32 %v85, 4294901760
    %v745 = vsub.f32 %v85, %v744
    %v746 = vand.u32 %v745, 4294901760
    %v747 = vsub.f32 %v745, %v746
    %v748 = vand.u32 %v747, 4294901760
    %749 = vmatpush.msra.mxu0 %v748
    %v750 = vand.u32 %v82, 4294901760
    %v751 = vsub.f32 %v82, %v750
    %v752 = vand.u32 %v751, 4294901760
    %v753 = vsub.f32 %v751, %v752
    %v754 = vand.u32 %v753, 4294901760
    %755 = vmatpush.msra.mxu0 %v754
    %v756 = vand.u32 %v79, 4294901760
    %v757 = vsub.f32 %v79, %v756
    %v758 = vand.u32 %v757, 4294901760
    %v759 = vsub.f32 %v757, %v758
    %v760 = vand.u32 %v759, 4294901760
    %761 = vmatpush.msra.mxu0 %v760
    %v762 = vand.u32 %v76, 4294901760
    %v763 = vsub.f32 %v76, %v762
    %v764 = vand.u32 %v763, 4294901760
    %v765 = vsub.f32 %v763, %v764
    %v766 = vand.u32 %v765, 4294901760
    %767 = vmatpush.msra.mxu0 %v766
    %v768 = vand.u32 %v73, 4294901760
    %v769 = vsub.f32 %v73, %v768
    %v770 = vand.u32 %v769, 4294901760
    %v771 = vsub.f32 %v769, %v770
    %v772 = vand.u32 %v771, 4294901760
    %773 = vmatpush.msra.mxu0 %v772
    %v774 = vand.u32 %v70, 4294901760
    %v775 = vsub.f32 %v70, %v774
    %v776 = vand.u32 %v775, 4294901760
    %v777 = vsub.f32 %v775, %v776
    %v778 = vand.u32 %v777, 4294901760
    %779 = vmatpush.msra.mxu0 %v778
    %v780 = vand.u32 %v67, 4294901760
    %v781 = vsub.f32 %v67, %v780
    %v782 = vand.u32 %v781, 4294901760
    %v783 = vsub.f32 %v781, %v782
    %v784 = vand.u32 %v783, 4294901760
    %785 = vmatpush.msra.mxu0 %v784
    %v786 = vand.u32 %v64, 4294901760
    %v787 = vsub.f32 %v64, %v786
    %v788 = vand.u32 %v787, 4294901760
    %v789 = vsub.f32 %v787, %v788
    %v790 = vand.u32 %v789, 4294901760
    %791 = vmatpush.msra.mxu0 %v790
    %v792 = vand.u32 %v61, 4294901760
    %v793 = vsub.f32 %v61, %v792
    %v794 = vand.u32 %v793, 4294901760
    %v795 = vsub.f32 %v793, %v794
    %v796 = vand.u32 %v795, 4294901760
    %797 = vmatpush.msra.mxu0 %v796
    %v798 = vand.u32 %v105, 4294901760
    %799 = vmatmul.f32.gmra.mxu0 %v798
    %v800 = vpop.f32.mrf.mxu0
    %v801 = vadd.f32 %v720, %v800
    %802 = vdwg.mxu0
    %803 = vmatpush.msra.mxu0 0.0
    %804 = vmatpush.msra.mxu0 0.0
    %805 = vmatpush.msra.mxu0 0.0
    %806 = vmatpush.msra.mxu0 0.0
    %v807 = vand.u32 %v94, 4294901760
    %v808 = vsub.f32 %v94, %v807
    %809 = vmatpush.msra.mxu0 %v808
    %v810 = vand.u32 %v91, 4294901760
    %v811 = vsub.f32 %v91, %v810
    %812 = vmatpush.msra.mxu0 %v811
    %v813 = vand.u32 %v88, 4294901760
    %v814 = vsub.f32 %v88, %v813
    %815 = vmatpush.msra.mxu0 %v814
    %v816 = vand.u32 %v85, 4294901760
    %v817 = vsub.f32 %v85, %v816
    %818 = vmatpush.msra.mxu0 %v817
    %v819 = vand.u32 %v82, 4294901760
    %v820 = vsub.f32 %v82, %v819
    %821 = vmatpush.msra.mxu0 %v820
    %v822 = vand.u32 %v79, 4294901760
    %v823 = vsub.f32 %v79, %v822
    %824 = vmatpush.msra.mxu0 %v823
    %v825 = vand.u32 %v76, 4294901760
    %v826 = vsub.f32 %v76, %v825
    %827 = vmatpush.msra.mxu0 %v826
    %v828 = vand.u32 %v73, 4294901760
    %v829 = vsub.f32 %v73, %v828
    %830 = vmatpush.msra.mxu0 %v829
    %v831 = vand.u32 %v70, 4294901760
    %v832 = vsub.f32 %v70, %v831
    %833 = vmatpush.msra.mxu0 %v832
    %v834 = vand.u32 %v67, 4294901760
    %v835 = vsub.f32 %v67, %v834
    %836 = vmatpush.msra.mxu0 %v835
    %v837 = vand.u32 %v64, 4294901760
    %v838 = vsub.f32 %v64, %v837
    %839 = vmatpush.msra.mxu0 %v838
    %v840 = vand.u32 %v61, 4294901760
    %v841 = vsub.f32 %v61, %v840
    %842 = vmatpush.msra.mxu0 %v841
    %v843 = vand.u32 %v105, 4294901760
    %v844 = vsub.f32 %v105, %v843
    %845 = vmatmul.f32.gmra.mxu0 %v844
    %v846 = vpop.f32.mrf.mxu0
    %v847 = vadd.f32 %v801, %v846
    %848 = vdwg.mxu0
    %849 = vmatpush.msra.mxu0 0.0
    %850 = vmatpush.msra.mxu0 0.0
    %851 = vmatpush.msra.mxu0 0.0
    %852 = vmatpush.msra.mxu0 0.0
    %v853 = vand.u32 %v94, 4294901760
    %854 = vmatpush.msra.mxu0 %v853
    %v855 = vand.u32 %v91, 4294901760
    %856 = vmatpush.msra.mxu0 %v855
    %v857 = vand.u32 %v88, 4294901760
    %858 = vmatpush.msra.mxu0 %v857
    %v859 = vand.u32 %v85, 4294901760
    %860 = vmatpush.msra.mxu0 %v859
    %v861 = vand.u32 %v82, 4294901760
    %862 = vmatpush.msra.mxu0 %v861
    %v863 = vand.u32 %v79, 4294901760
    %864 = vmatpush.msra.mxu0 %v863
    %v865 = vand.u32 %v76, 4294901760
    %866 = vmatpush.msra.mxu0 %v865
    %v867 = vand.u32 %v73, 4294901760
    %868 = vmatpush.msra.mxu0 %v867
    %v869 = vand.u32 %v70, 4294901760
    %870 = vmatpush.msra.mxu0 %v869
    %v871 = vand.u32 %v67, 4294901760
    %872 = vmatpush.msra.mxu0 %v871
    %v873 = vand.u32 %v64, 4294901760
    %874 = vmatpush.msra.mxu0 %v873
    %v875 = vand.u32 %v61, 4294901760
    %876 = vmatpush.msra.mxu0 %v875
    %v877 = vand.u32 %v105, 4294901760
    %v878 = vsub.f32 %v105, %v877
    %v879 = vand.u32 %v878, 4294901760
    %880 = vmatmul.f32.gmra.mxu0 %v879
    %v881 = vpop.f32.mrf.mxu0
    %v882 = vadd.f32 %v847, %v881
    %883 = vdwg.mxu0
    %884 = vmatpush.msra.mxu0 0.0
    %885 = vmatpush.msra.mxu0 0.0
    %886 = vmatpush.msra.mxu0 0.0
    %887 = vmatpush.msra.mxu0 0.0
    %v888 = vand.u32 %v94, 4294901760
    %v889 = vsub.f32 %v94, %v888
    %v890 = vand.u32 %v889, 4294901760
    %891 = vmatpush.msra.mxu0 %v890
    %v892 = vand.u32 %v91, 4294901760
    %v893 = vsub.f32 %v91, %v892
    %v894 = vand.u32 %v893, 4294901760
    %895 = vmatpush.msra.mxu0 %v894
    %v896 = vand.u32 %v88, 4294901760
    %v897 = vsub.f32 %v88, %v896
    %v898 = vand.u32 %v897, 4294901760
    %899 = vmatpush.msra.mxu0 %v898
    %v900 = vand.u32 %v85, 4294901760
    %v901 = vsub.f32 %v85, %v900
    %v902 = vand.u32 %v901, 4294901760
    %903 = vmatpush.msra.mxu0 %v902
    %v904 = vand.u32 %v82, 4294901760
    %v905 = vsub.f32 %v82, %v904
    %v906 = vand.u32 %v905, 4294901760
    %907 = vmatpush.msra.mxu0 %v906
    %v908 = vand.u32 %v79, 4294901760
    %v909 = vsub.f32 %v79, %v908
    %v910 = vand.u32 %v909, 4294901760
    %911 = vmatpush.msra.mxu0 %v910
    %v912 = vand.u32 %v76, 4294901760
    %v913 = vsub.f32 %v76, %v912
    %v914 = vand.u32 %v913, 4294901760
    %915 = vmatpush.msra.mxu0 %v914
    %v916 = vand.u32 %v73, 4294901760
    %v917 = vsub.f32 %v73, %v916
    %v918 = vand.u32 %v917, 4294901760
    %919 = vmatpush.msra.mxu0 %v918
    %v920 = vand.u32 %v70, 4294901760
    %v921 = vsub.f32 %v70, %v920
    %v922 = vand.u32 %v921, 4294901760
    %923 = vmatpush.msra.mxu0 %v922
    %v924 = vand.u32 %v67, 4294901760
    %v925 = vsub.f32 %v67, %v924
    %v926 = vand.u32 %v925, 4294901760
    %927 = vmatpush.msra.mxu0 %v926
    %v928 = vand.u32 %v64, 4294901760
    %v929 = vsub.f32 %v64, %v928
    %v930 = vand.u32 %v929, 4294901760
    %931 = vmatpush.msra.mxu0 %v930
    %v932 = vand.u32 %v61, 4294901760
    %v933 = vsub.f32 %v61, %v932
    %v934 = vand.u32 %v933, 4294901760
    %935 = vmatpush.msra.mxu0 %v934
    %v936 = vand.u32 %v105, 4294901760
    %937 = vmatmul.f32.gmra.mxu0 %v936
    %v938 = vpop.f32.mrf.mxu0
    %v939 = vadd.f32 %v882, %v938
    %940 = vdwg.mxu0
    %941 = vmatpush.msra.mxu0 0.0
    %942 = vmatpush.msra.mxu0 0.0
    %943 = vmatpush.msra.mxu0 0.0
    %944 = vmatpush.msra.mxu0 0.0
    %v945 = vand.u32 %v94, 4294901760
    %946 = vmatpush.msra.mxu0 %v945
    %v947 = vand.u32 %v91, 4294901760
    %948 = vmatpush.msra.mxu0 %v947
    %v949 = vand.u32 %v88, 4294901760
    %950 = vmatpush.msra.mxu0 %v949
    %v951 = vand.u32 %v85, 4294901760
    %952 = vmatpush.msra.mxu0 %v951
    %v953 = vand.u32 %v82, 4294901760
    %954 = vmatpush.msra.mxu0 %v953
    %v955 = vand.u32 %v79, 4294901760
    %956 = vmatpush.msra.mxu0 %v955
    %v957 = vand.u32 %v76, 4294901760
    %958 = vmatpush.msra.mxu0 %v957
    %v959 = vand.u32 %v73, 4294901760
    %960 = vmatpush.msra.mxu0 %v959
    %v961 = vand.u32 %v70, 4294901760
    %962 = vmatpush.msra.mxu0 %v961
    %v963 = vand.u32 %v67, 4294901760
    %964 = vmatpush.msra.mxu0 %v963
    %v965 = vand.u32 %v64, 4294901760
    %966 = vmatpush.msra.mxu0 %v965
    %v967 = vand.u32 %v61, 4294901760
    %968 = vmatpush.msra.mxu0 %v967
    %v969 = vand.u32 %v105, 4294901760
    %970 = vmatmul.f32.gmra.mxu0 %v969
    %v971 = vpop.f32.mrf.mxu0
    %v972 = vadd.f32 %v939, %v971
    %973 = vdwg.mxu0
    %974 = vst [vmem:[#allocation8] sm:$0xff] %v394
    %975 = vst [vmem:[#allocation8 + $0x8] sm:$0xff] %v683
    %976 = vst [vmem:[#allocation8 + $0x10] sm:$0xff] %v972
    // Predicated region
    $region26: #{tpu_custom_call.1} parent=1 // pred_check
      _
    $region27: #{tpu_custom_call.1} parent=1 // pred_check_branch
      %978 = sbr.rel (0) target = $region29
    $region28: #{tpu_custom_call.1} parent=1 // pred_region
      %980 = vsyncadd [#allocation4], 0
      %s982 = sshll.u32 [#allocation8], 4
      %s983 = int_to_ptr.vmem [resolvable:$true] %s982
      %s984 = sshll.u32 %s3, 4
      %s985 = int_to_ptr.hbm [resolvable:$true] %s984
      %987 = dma.vmem_to_hbm [thread:$0]  %s983, 384, %s985, [#allocation4]
    $region29: #{tpu_custom_call.1} parent=1 // pred_fallthru
      _
    // Predicated region
    $region30: #{tpu_custom_call.1} parent=1 // pred_check
      _
    $region31: #{tpu_custom_call.1} parent=1 // pred_check_branch
      %989 = sbr.rel (0) target = $region33
    $region32: #{tpu_custom_call.1} parent=1 // pred_region
      %991 = dma.done [#allocation4], 384
    $region33: #{tpu_custom_call.1} parent=1 // pred_fallthru
      _
    %992 = vsyncpa [#allocation3], 1
    %993 = vsyncpa [#allocation6], 1
    %994 = vsyncpa [#allocation4], 1

</llo_original>
